<compile_context>
chip_gen: v5e
topology: v5e:2x2
jax: 0.10.0
libtpu: 0.0.40
codegen_flags: <defaults>
</compile_context>

<pallas_src>
import functools

import jax
import jax.numpy as jnp
from jax import lax
from jax.experimental import pallas as pl
from jax.experimental.pallas import tpu as pltpu


# ----------------------------------------------------------------------------
# Fused kernel: 1x1 conv + sigmoid, masked average pools, BN scale/shift
# ----------------------------------------------------------------------------
def attn_pool_bn_kernel(x_ref, w_ref, b_ref, scale_ref, shift_ref, out_ref,
                        *, num_parts):
    # x_ref:     (BB, C, HW)   batch block, NCHW layout flattened over spatial
    # w_ref:     (Pp, C)       1x1 conv weight, zero-padded parts axis (Pp>=P+1)
    # b_ref:     (Pp, 1)       1x1 conv bias (padded rows are don't-care), f32
    # scale_ref: (P+1, C)      fused BN scale, 1/HW folded in, f32
    # shift_ref: (P+1, C)      fused BN shift, f32
    # out_ref:   (BB, P+1, C)  rows 0..P-1 = part features, row P = global pool
    w = w_ref[...]
    bias = b_ref[...]
    scale = scale_ref[...]
    shift = shift_ref[...]
    p1 = scale.shape[0]                      # = P + 1 (static)

    for b in range(x_ref.shape[0]):          # static, small batch block
        x = x_ref[b]                         # (C, HW), native dtype (f32/bf16)

        # 1x1 conv over channels (MXU, f32 accumulate) + bias
        logits = jnp.dot(w, x, preferred_element_type=jnp.float32) + bias   # (Pp, HW)

        # sigmoid on the real part rows; padded rows forced to 1.0 so the same
        # pooling matmul also produces the plain global average pool.
        row = lax.broadcasted_iota(jnp.int32, logits.shape, 0)
        masks = jnp.where(row < num_parts, jax.nn.sigmoid(logits), 1.0)     # (Pp, HW)

        # pooled[p, c] = sum_hw masks[p, hw] * x[c, hw]   (MXU, f32 accumulate)
        pooled = lax.dot_general(masks.astype(x.dtype), x,
                                 (((1,), (1,)), ((), ())),
                                 preferred_element_type=jnp.float32)        # (Pp, C)

        # fused mean (1/HW) + BatchNorm1d (inference) scale/shift
        out_ref[b] = (pooled[:p1] * scale + shift).astype(out_ref.dtype)


# ----------------------------------------------------------------------------
# Wrapper
# ----------------------------------------------------------------------------
@functools.partial(jax.jit, static_argnames=("eps",))
def baseline_forward(global_feat_nchw, conv_w, conv_b,
                     bn_gamma, bn_beta, bn_mean, bn_var, eps=1e-5):
    B, C, H, W = global_feat_nchw.shape
    P = conv_w.shape[0]
    HW = H * W
    P1 = P + 1
    Pp = max(8, ((P1 + 7) // 8) * 8)         # pad parts axis to sublane multiple

    # NCHW -> (B, C, HW): contiguous reshape, no data movement.
    x = global_feat_nchw.reshape(B, C, HW)
    dt = x.dtype

    # Zero-padded 1x1 conv weight / bias (kept in the activation dtype for MXU).
    w_pad = jnp.zeros((Pp, C), dt).at[:P].set(conv_w.reshape(P, C).astype(dt))
    b_pad = jnp.zeros((Pp, 1), jnp.float32).at[:P, 0].set(conv_b.astype(jnp.float32))

    # Fold BatchNorm1d (inference) + 1/HW mean into a single scale/shift.
    s = (bn_gamma / jnp.sqrt(bn_var + eps)).astype(jnp.float32)
    scale = (s / HW).reshape(P1, C)
    shift = (bn_beta.astype(jnp.float32) - bn_mean.astype(jnp.float32) * s).reshape(P1, C)

    # Batch blocking: a few elements per grid step to amortize step overhead.
    bb = 1
    for cand in (8, 4, 2):
        if B % cand == 0:
            bb = cand
            break

    kernel = functools.partial(attn_pool_bn_kernel, num_parts=P)

    pooled = pl.pallas_call(
        kernel,
        out_shape=jax.ShapeDtypeStruct((B, P1, C), jnp.float32),
        grid_spec=pltpu.PrefetchScalarGridSpec(
            num_scalar_prefetch=0,
            grid=(B // bb,),
            in_specs=[
                pl.BlockSpec((bb, C, HW), lambda i: (i, 0, 0)),
                pl.BlockSpec((Pp, C), lambda i: (0, 0)),
                pl.BlockSpec((Pp, 1), lambda i: (0, 0)),
                pl.BlockSpec((P1, C), lambda i: (0, 0)),
                pl.BlockSpec((P1, C), lambda i: (0, 0)),
            ],
            out_specs=pl.BlockSpec((bb, P1, C), lambda i: (i, 0, 0)),
        ),
        compiler_params=pltpu.CompilerParams(dimension_semantics=("parallel",)),
    )(x, w_pad, b_pad, scale, shift)

    # concat([part_0 .. part_{P-1}, global], dim=1) == row-major reshape (free).
    return pooled.reshape(B, P1 * C)


# ----------------------------------------------------------------------------
# Pure-JAX reference (mirrors the PyTorch ops)
# ----------------------------------------------------------------------------
def reference_forward(global_feat, conv_w, conv_b,
                      bn_gamma, bn_beta, bn_mean, bn_var, eps=1e-5):
    B, C, H, W = global_feat.shape
    P = conv_w.shape[0]
    logits = jnp.einsum('bchw,pc->bphw', global_feat, conv_w.reshape(P, C))
    logits = logits + conv_b[None, :, None, None]
    masks = jax.nn.sigmoid(logits)
    feats = []
    for i in range(P):
        feats.append((masks[:, i:i + 1] * global_feat).mean(axis=(2, 3)))
    feats.append(global_feat.mean(axis=(2, 3)))
    feats = jnp.concatenate(feats, axis=1)
    return (feats - bn_mean) / jnp.sqrt(bn_var + eps) * bn_gamma + bn_beta


if __name__ == "__main__":
    # Small, deterministic shapes (stand-in for base_dim=2048, 16x8 feature map)
    B, C, H, W = 2, 32, 16, 8     # global_feat (backbone output), NCHW
    P = 6                         # num_parts (pattern_attention default)

    key = jax.random.PRNGKey(0)
    k1, k2, k3, k4, k5 = jax.random.split(key, 5)

    global_feat = jax.random.normal(k1, (B, C, H, W), jnp.float32)

    # spatial_attention: Conv2d(C, P, kernel_size=1, bias=True), bias init 0
    conv_w = jax.random.normal(k2, (P, C, 1, 1), jnp.float32) * 0.05
    conv_b = jnp.zeros((P,), jnp.float32)

    # bn_neck: BatchNorm1d(C*(P+1)); bias init 0 (frozen); nontrivial running stats
    F_dim = C * (P + 1)
    bn_gamma = 1.0 + 0.1 * jax.random.normal(k3, (F_dim,), jnp.float32)
    bn_beta = jnp.zeros((F_dim,), jnp.float32)
    bn_mean = 0.1 * jax.random.normal(k4, (F_dim,), jnp.float32)
    bn_var = 1.0 + 0.1 * jax.random.uniform(k5, (F_dim,), jnp.float32)

    # TODO(synk): ResNet50 backbone, cv2/SSIM image-path scoring, and the
    # train_item==1 mask-swap branch are host-side / file-dependent and are not
    # translated; the kernel starts from the backbone feature map.

    ref = reference_forward(global_feat, conv_w, conv_b,
                            bn_gamma, bn_beta, bn_mean, bn_var)

    # f32 path
    out = baseline_forward(global_feat, conv_w, conv_b,
                           bn_gamma, bn_beta, bn_mean, bn_var)
    out = jax.block_until_ready(out)
    assert out.shape == (B, F_dim)
    assert jnp.allclose(out, ref, atol=1e-4, rtol=1e-4), "f32 mismatch vs reference"

    # bf16 activation path (backbone output in bf16: half the HBM traffic)
    out_bf16 = baseline_forward(global_feat.astype(jnp.bfloat16), conv_w, conv_b,
                                bn_gamma, bn_beta, bn_mean, bn_var)
    out_bf16 = jax.block_until_ready(out_bf16)
    assert jnp.allclose(out_bf16, ref, atol=5e-2, rtol=5e-2), "bf16 mismatch vs reference"

    print("KERNEL_OK")
</pallas_src>

<mosaic_0001>
module attributes {stable_mosaic.version = 11 : i64} {
  func.func @attn_pool_bn_kernel(%arg0: i32, %arg1: memref<2x32x128xf32, #tpu.memory_space<vmem>>, %arg2: memref<8x32xf32, #tpu.memory_space<vmem>>, %arg3: memref<8x1xf32, #tpu.memory_space<vmem>>, %arg4: memref<7x32xf32, #tpu.memory_space<vmem>>, %arg5: memref<7x32xf32, #tpu.memory_space<vmem>>, %arg6: memref<2x7x32xf32, #tpu.memory_space<vmem>>) attributes {dimension_semantics = [#tpu.dimension_semantics<parallel>], iteration_bounds = array<i64: 1>, scalar_prefetch = 0 : i64, scratch_operands = 0 : i64, tpu.core_type = #tpu.core_type<tc>, window_params = [{transform_indices = @transform_0, window_bounds = array<i64: 2, 32, 128>}, {pipeline_mode = #tpu.pipeline_mode<synchronous>, transform_indices = @transform_1, window_bounds = array<i64: 8, 32>}, {pipeline_mode = #tpu.pipeline_mode<synchronous>, transform_indices = @transform_2, window_bounds = array<i64: 8, 1>}, {pipeline_mode = #tpu.pipeline_mode<synchronous>, transform_indices = @transform_3, window_bounds = array<i64: 7, 32>}, {pipeline_mode = #tpu.pipeline_mode<synchronous>, transform_indices = @transform_4, window_bounds = array<i64: 7, 32>}, {transform_indices = @transform_5, window_bounds = array<i64: 2, 7, 32>}]} {
    %c0 = arith.constant 0 : index
    %c0_0 = arith.constant 0 : index
    %0 = vector.load %arg2[%c0, %c0_0] : memref<8x32xf32, #tpu.memory_space<vmem>>, vector<8x32xf32>
    %c0_1 = arith.constant 0 : index
    %c0_2 = arith.constant 0 : index
    %1 = vector.load %arg3[%c0_1, %c0_2] : memref<8x1xf32, #tpu.memory_space<vmem>>, vector<8x1xf32>
    %c0_3 = arith.constant 0 : index
    %c0_4 = arith.constant 0 : index
    %2 = vector.load %arg4[%c0_3, %c0_4] : memref<7x32xf32, #tpu.memory_space<vmem>>, vector<7x32xf32>
    %c0_5 = arith.constant 0 : index
    %c0_6 = arith.constant 0 : index
    %3 = vector.load %arg5[%c0_5, %c0_6] : memref<7x32xf32, #tpu.memory_space<vmem>>, vector<7x32xf32>
    %c0_7 = arith.constant 0 : index
    %c0_8 = arith.constant 0 : index
    %c0_9 = arith.constant 0 : index
    %4 = vector.load %arg1[%c0_7, %c0_8, %c0_9] : memref<2x32x128xf32, #tpu.memory_space<vmem>>, vector<1x32x128xf32>
    %5 = vector.shape_cast %4 : vector<1x32x128xf32> to vector<32x128xf32>
    %cst = arith.constant dense<0.000000e+00> : vector<8x128xf32>
    %6 = tpu.matmul %0, %5, %cst {dimension_numbers = #tpu.dot_dimension_numbers<[1], [0], [0], [1], [0, 0, 1, 1], [], []>} : vector<8x32xf32>, vector<32x128xf32>, vector<8x128xf32> -> vector<8x128xf32>
    %7 = vector.broadcast %1 : vector<8x1xf32> to vector<8x128xf32>
    %8 = arith.addf %6, %7 : vector<8x128xf32>
    %9 = tpu.iota {dimensions = array<i32: 0>} : vector<8x128xi32>
    %c6_i32 = arith.constant 6 : i32
    %10 = vector.broadcast %c6_i32 : i32 to vector<8x128xi32>
    %11 = arith.cmpi slt, %9, %10 : vector<8x128xi32>
    %12 = arith.negf %8 : vector<8x128xf32>
    %13 = math.exp %12 : vector<8x128xf32>
    %cst_10 = arith.constant 1.000000e+00 : f32
    %14 = vector.broadcast %cst_10 : f32 to vector<8x128xf32>
    %15 = arith.addf %14, %13 : vector<8x128xf32>
    %16 = arith.divf %14, %15 : vector<8x128xf32>
    %cst_11 = arith.constant 1.000000e+00 : f32
    %17 = vector.broadcast %cst_11 : f32 to vector<8x128xf32>
    %18 = arith.select %11, %16, %17 : vector<8x128xi1>, vector<8x128xf32>
    %cst_12 = arith.constant dense<0.000000e+00> : vector<8x32xf32>
    %19 = tpu.matmul %18, %5, %cst_12 {dimension_numbers = #tpu.dot_dimension_numbers<[1], [1], [0], [0], [0, 0, 1, 0], [], []>} : vector<8x128xf32>, vector<32x128xf32>, vector<8x32xf32> -> vector<8x32xf32>
    %20 = vector.extract_strided_slice %19 {offsets = [0, 0], sizes = [7, 32], strides = [1, 1]} : vector<8x32xf32> to vector<7x32xf32>
    %21 = arith.mulf %20, %2 : vector<7x32xf32>
    %22 = arith.addf %21, %3 : vector<7x32xf32>
    %c0_13 = arith.constant 0 : index
    %c0_14 = arith.constant 0 : index
    %c0_15 = arith.constant 0 : index
    %23 = vector.load %arg6[%c0_13, %c0_14, %c0_15] : memref<2x7x32xf32, #tpu.memory_space<vmem>>, vector<1x7x32xf32>
    %24 = vector.shape_cast %23 : vector<1x7x32xf32> to vector<7x32xf32>
    %25 = vector.shape_cast %22 : vector<7x32xf32> to vector<1x7x32xf32>
    tpu.vector_store %arg6[%c0_13, %c0_14, %c0_15], %25 {strides = array<i32>} : memref<2x7x32xf32, #tpu.memory_space<vmem>>, vector<1x7x32xf32>,
    %c1 = arith.constant 1 : index
    %c0_16 = arith.constant 0 : index
    %c0_17 = arith.constant 0 : index
    %26 = vector.load %arg1[%c1, %c0_16, %c0_17] : memref<2x32x128xf32, #tpu.memory_space<vmem>>, vector<1x32x128xf32>
    %27 = vector.shape_cast %26 : vector<1x32x128xf32> to vector<32x128xf32>
    %cst_18 = arith.constant dense<0.000000e+00> : vector<8x128xf32>
    %28 = tpu.matmul %0, %27, %cst_18 {dimension_numbers = #tpu.dot_dimension_numbers<[1], [0], [0], [1], [0, 0, 1, 1], [], []>} : vector<8x32xf32>, vector<32x128xf32>, vector<8x128xf32> -> vector<8x128xf32>
    %29 = vector.broadcast %1 : vector<8x1xf32> to vector<8x128xf32>
    %30 = arith.addf %28, %29 : vector<8x128xf32>
    %31 = tpu.iota {dimensions = array<i32: 0>} : vector<8x128xi32>
    %c6_i32_19 = arith.constant 6 : i32
    %32 = vector.broadcast %c6_i32_19 : i32 to vector<8x128xi32>
    %33 = arith.cmpi slt, %31, %32 : vector<8x128xi32>
    %34 = arith.negf %30 : vector<8x128xf32>
    %35 = math.exp %34 : vector<8x128xf32>
    %cst_20 = arith.constant 1.000000e+00 : f32
    %36 = vector.broadcast %cst_20 : f32 to vector<8x128xf32>
    %37 = arith.addf %36, %35 : vector<8x128xf32>
    %38 = arith.divf %36, %37 : vector<8x128xf32>
    %cst_21 = arith.constant 1.000000e+00 : f32
    %39 = vector.broadcast %cst_21 : f32 to vector<8x128xf32>
    %40 = arith.select %33, %38, %39 : vector<8x128xi1>, vector<8x128xf32>
    %cst_22 = arith.constant dense<0.000000e+00> : vector<8x32xf32>
    %41 = tpu.matmul %40, %27, %cst_22 {dimension_numbers = #tpu.dot_dimension_numbers<[1], [1], [0], [0], [0, 0, 1, 0], [], []>} : vector<8x128xf32>, vector<32x128xf32>, vector<8x32xf32> -> vector<8x32xf32>
    %42 = vector.extract_strided_slice %41 {offsets = [0, 0], sizes = [7, 32], strides = [1, 1]} : vector<8x32xf32> to vector<7x32xf32>
    %43 = arith.mulf %42, %2 : vector<7x32xf32>
    %44 = arith.addf %43, %3 : vector<7x32xf32>
    %c1_23 = arith.constant 1 : index
    %c0_24 = arith.constant 0 : index
    %c0_25 = arith.constant 0 : index
    %45 = vector.load %arg6[%c1_23, %c0_24, %c0_25] : memref<2x7x32xf32, #tpu.memory_space<vmem>>, vector<1x7x32xf32>
    %46 = vector.shape_cast %45 : vector<1x7x32xf32> to vector<7x32xf32>
    %47 = vector.shape_cast %44 : vector<7x32xf32> to vector<1x7x32xf32>
    tpu.vector_store %arg6[%c1_23, %c0_24, %c0_25], %47 {strides = array<i32>} : memref<2x7x32xf32, #tpu.memory_space<vmem>>, vector<1x7x32xf32>,
    return
  }
  func.func @transform_0(%arg0: i32) -> (i32, i32, i32) {
    %c0_i32 = arith.constant 0 : i32
    %c0_i32_0 = arith.constant 0 : i32
    %c0_i32_1 = arith.constant 0 : i32
    return %arg0, %c0_i32, %c0_i32_0 : i32, i32, i32
  }
  func.func @transform_1(%arg0: i32) -> (i32, i32) {
    %c0_i32 = arith.constant 0 : i32
    %c0_i32_0 = arith.constant 0 : i32
    %c0_i32_1 = arith.constant 0 : i32
    return %c0_i32, %c0_i32_0 : i32, i32
  }
  func.func @transform_2(%arg0: i32) -> (i32, i32) {
    %c0_i32 = arith.constant 0 : i32
    %c0_i32_0 = arith.constant 0 : i32
    %c0_i32_1 = arith.constant 0 : i32
    return %c0_i32, %c0_i32_0 : i32, i32
  }
  func.func @transform_3(%arg0: i32) -> (i32, i32) {
    %c0_i32 = arith.constant 0 : i32
    %c0_i32_0 = arith.constant 0 : i32
    %c0_i32_1 = arith.constant 0 : i32
    return %c0_i32, %c0_i32_0 : i32, i32
  }
  func.func @transform_4(%arg0: i32) -> (i32, i32) {
    %c0_i32 = arith.constant 0 : i32
    %c0_i32_0 = arith.constant 0 : i32
    %c0_i32_1 = arith.constant 0 : i32
    return %c0_i32, %c0_i32_0 : i32, i32
  }
  func.func @transform_5(%arg0: i32) -> (i32, i32, i32) {
    %c0_i32 = arith.constant 0 : i32
    %c0_i32_0 = arith.constant 0 : i32
    %c0_i32_1 = arith.constant 0 : i32
    return %arg0, %c0_i32, %c0_i32_0 : i32, i32, i32
  }
}

</mosaic_0001>

<llo_original>
// kernel: baseline_forward.1
$region0: #{baseline_forward.1}
  #allocation0 [shape = 'u32[]', space=smem, size = 0x4, offset = 0x4, fixed_abs, tag = 'smem constant byte address 0x4 - core index']
  #allocation1 [shape = 'u32[72,128]{1,0:T(1,128)}', space=vmem, size = 0x9000, scoped, tag = 'internal scratch']
  %s0 = inlined_call_operand.vmem [shape: f32[2,32,128], index: 0, kind: input, shape index: {}]
  %s1 = inlined_call_operand.vmem [shape: f32[8,32], index: 1, kind: input, shape index: {}]
  %s2 = inlined_call_operand.vmem [shape: f32[8,1], index: 2, kind: input, shape index: {}]
  %s3 = inlined_call_operand.vmem [shape: f32[7,32], index: 3, kind: input, shape index: {}]
  %s4 = inlined_call_operand.vmem [shape: f32[7,32], index: 4, kind: input, shape index: {}]
  %s5 = inlined_call_operand.vmem [shape: f32[2,7,32], index: 5, kind: output, shape index: {}]
  %s6 = sld [smem:[#allocation0]]
  $region30: #{baseline_forward.1} parent=0
    _
  %s8 = ssub.s32 1, %s6
  %s9 = scalar_select 0, %s8, %s6
  // Predicated region
  $region2: #{baseline_forward.1} parent=0 // pred_check
    _
  $region3: #{baseline_forward.1} parent=0 // pred_check_branch
    %11 = sbr.rel (0) target = $region5
  $region4: #{baseline_forward.1} parent=0 // pred_region
    _
  $region5: #{baseline_forward.1} parent=0 // pred_fallthru
    _
  // Predicated region
  $region6: #{baseline_forward.1} parent=0 // pred_check
    _
  $region7: #{baseline_forward.1} parent=0 // pred_check_branch
    %13 = sbr.rel (0) target = $region9
  $region8: #{baseline_forward.1} parent=0 // pred_region
    _
  $region9: #{baseline_forward.1} parent=0 // pred_fallthru
    _
  // Predicated region
  $region10: #{baseline_forward.1} parent=0 // pred_check
    _
  $region11: #{baseline_forward.1} parent=0 // pred_check_branch
    %15 = sbr.rel (0) target = $region13
  $region12: #{baseline_forward.1} parent=0 // pred_region
    _
  $region13: #{baseline_forward.1} parent=0 // pred_fallthru
    _
  // Predicated region
  $region14: #{baseline_forward.1} parent=0 // pred_check
    _
  $region15: #{baseline_forward.1} parent=0 // pred_check_branch
    %17 = sbr.rel (0) target = $region17
  $region16: #{baseline_forward.1} parent=0 // pred_region
    _
  $region17: #{baseline_forward.1} parent=0 // pred_fallthru
    _
  // Predicated region
  $region18: #{baseline_forward.1} parent=0 // pred_check
    _
  $region19: #{baseline_forward.1} parent=0 // pred_check_branch
    %19 = sbr.rel (0) target = $region21
  $region20: #{baseline_forward.1} parent=0 // pred_region
    _
  $region21: #{baseline_forward.1} parent=0 // pred_fallthru
    _
  %v20 = vld [vmem:[%s1] sm:$0xff]
  %v21 = vld [vmem:[%s2] sm:$0xff]
  %v22 = vld [vmem:[%s3] sm:$0x7f]
  %v23 = vld [vmem:[%s4] sm:$0x7f]
  %v24 = vld [vmem:[%s0] sm:$0xff]
  %v25 = vld [vmem:[%s0 + $0x8] sm:$0xff]
  %v26 = vld [vmem:[%s0 + $0x10] sm:$0xff]
  %v27 = vld [vmem:[%s0 + $0x18] sm:$0xff]
  %29 = vset.pattern.permute.xlu0 0
  %30 = vperm.xlu0 %29, %v21
  %v31 = vpop.permute.xlu0 %30
  %vm33 = vcmask 261120
  %v35 = vsel %vm33, %v20, 0
  %37 = vmatpush.msra.mxu0 0.0
  %38 = vmatpush.msra.mxu0 0.0
  %39 = vmatpush.msra.mxu0 0.0
  %40 = vmatpush.msra.mxu0 0.0
  %41 = vmatpush.msra.mxu0 0.0
  %42 = vmatpush.msra.mxu0 0.0
  %43 = vmatpush.msra.mxu0 0.0
  %44 = vmatpush.msra.mxu0 0.0
  %45 = vmatpush.msra.mxu0 0.0
  %46 = vmatpush.msra.mxu0 0.0
  %47 = vmatpush.msra.mxu0 0.0
  %48 = vmatpush.msra.mxu0 0.0
  %49 = vmatpush.msra.mxu0 %v27
  %50 = vmatpush.msra.mxu0 %v26
  %51 = vmatpush.msra.mxu0 %v25
  %52 = vmatpush.msra.mxu0 %v24
  %53 = vmatmul.f32.gmra.mxu0 %v35
  %v54 = vpop.f32.mrf.mxu0
  %v55 = vadd.f32 %v31, %v54
  %56 = vdwg.mxu0
  %v57 = vlaneseq
  %v58 = vshrl.u32 %v57, 7
  %vm59 = vcmp.lt.s32.totalorder %v58, 6
  %v60 = vxor.u32 %v55, 2147483648
  %v61 = vmul.f32 %v60, 1.442695
  %v62 = vpow.pop %v61
  %v63 = vadd.f32 %v62, 1.0
  %v64 = vrcp.pop %v63
  %v65 = vmul.f32 %v63, %v64
  %v66 = vsub.f32 1.0, %v65
  %v67 = vmul.f32 %v64, %v66
  %v68 = vadd.f32 %v64, %v67
  %vm69 = vweird.f32 %v63
  %vm70 = vweird.f32 %v64
  %vm71 = vmor %vm69, %vm70
  %v72 = vsel %vm71, %v64, %v68
  %v73 = vand.u32 2147483647, %v63
  %vm74 = vcmp.eq.f32.partialorder %v73, 8.507059e+37
  %v75 = vand.u32 %v63, 2147483648
  %v76 = vor.u32 1.1754944e-38, %v75
  %v77 = vsel %vm74, %v76, %v72
  %v78 = vmul.f32 1.0, %v77
  %v79 = vsel %vm59, %v78, 1.0
  %80 = vmatpush.xpose.msra.mxu0 0.0
  %81 = vmatpush.xpose.msra.mxu0 0.0
  %82 = vmatpush.xpose.msra.mxu0 0.0
  %83 = vmatpush.xpose.msra.mxu0 0.0
  %84 = vmatpush.xpose.msra.mxu0 0.0
  %85 = vmatpush.xpose.msra.mxu0 0.0
  %86 = vmatpush.xpose.msra.mxu0 0.0
  %87 = vmatpush.xpose.msra.mxu0 0.0
  %88 = vmatpush.xpose.msra.mxu0 0.0
  %89 = vmatpush.xpose.msra.mxu0 0.0
  %90 = vmatpush.xpose.msra.mxu0 0.0
  %91 = vmatpush.xpose.msra.mxu0 0.0
  %92 = vmatpush.xpose.msra.mxu0 %v27
  %93 = vmatpush.xpose.msra.mxu0 %v26
  %94 = vmatpush.xpose.msra.mxu0 %v25
  %95 = vmatpush.xpose.msra.mxu0 %v24
  %96 = vmatmul.f32.gmra.mxu0 %v79
  %v97 = vpop.f32.mrf.mxu0
  %v98 = vadd.f32 0.0, %v97
  %99 = vdwg.mxu0
  %v100 = vmul.f32 %v98, %v22
  %v101 = vadd.f32 %v100, %v23
  %vm102 = vcmask 260096
  %103 = vst.msk [vmem:[%s5] sm:$0x7f] %vm102, %v101
  %s104 = scalar_lea.vmem %s0, 32
  %v105 = vld [vmem:[%s104] sm:$0xff]
  %v106 = vld [vmem:[%s104 + $0x8] sm:$0xff]
  %v107 = vld [vmem:[%s104 + $0x10] sm:$0xff]
  %v108 = vld [vmem:[%s104 + $0x18] sm:$0xff]
  %109 = vmatpush.msra.mxu0 0.0
  %110 = vmatpush.msra.mxu0 0.0
  %111 = vmatpush.msra.mxu0 0.0
  %112 = vmatpush.msra.mxu0 0.0
  %113 = vmatpush.msra.mxu0 0.0
  %114 = vmatpush.msra.mxu0 0.0
  %115 = vmatpush.msra.mxu0 0.0
  %116 = vmatpush.msra.mxu0 0.0
  %117 = vmatpush.msra.mxu0 0.0
  %118 = vmatpush.msra.mxu0 0.0
  %119 = vmatpush.msra.mxu0 0.0
  %120 = vmatpush.msra.mxu0 0.0
  %121 = vmatpush.msra.mxu0 %v108
  %122 = vmatpush.msra.mxu0 %v107
  %123 = vmatpush.msra.mxu0 %v106
  %124 = vmatpush.msra.mxu0 %v105
  %125 = vmatmul.f32.gmra.mxu0 %v35
  %v126 = vpop.f32.mrf.mxu0
  %v127 = vadd.f32 %v31, %v126
  %128 = vdwg.mxu0
  %v129 = vxor.u32 %v127, 2147483648
  %v130 = vmul.f32 %v129, 1.442695
  %v131 = vpow.pop %v130
  %v132 = vadd.f32 %v131, 1.0
  %v133 = vrcp.pop %v132
  %v134 = vmul.f32 %v132, %v133
  %v135 = vsub.f32 1.0, %v134
  %v136 = vmul.f32 %v133, %v135
  %v137 = vadd.f32 %v133, %v136
  %vm138 = vweird.f32 %v132
  %vm139 = vweird.f32 %v133
  %vm140 = vmor %vm138, %vm139
  %v141 = vsel %vm140, %v133, %v137
  %v142 = vand.u32 2147483647, %v132
  %vm143 = vcmp.eq.f32.partialorder %v142, 8.507059e+37
  %v144 = vand.u32 %v132, 2147483648
  %v145 = vor.u32 1.1754944e-38, %v144
  %v146 = vsel %vm143, %v145, %v141
  %v147 = vmul.f32 1.0, %v146
  %v148 = vsel %vm59, %v147, 1.0
  %149 = vmatpush.xpose.msra.mxu0 0.0
  %150 = vmatpush.xpose.msra.mxu0 0.0
  %151 = vmatpush.xpose.msra.mxu0 0.0
  %152 = vmatpush.xpose.msra.mxu0 0.0
  %153 = vmatpush.xpose.msra.mxu0 0.0
  %154 = vmatpush.xpose.msra.mxu0 0.0
  %155 = vmatpush.xpose.msra.mxu0 0.0
  %156 = vmatpush.xpose.msra.mxu0 0.0
  %157 = vmatpush.xpose.msra.mxu0 0.0
  %158 = vmatpush.xpose.msra.mxu0 0.0
  %159 = vmatpush.xpose.msra.mxu0 0.0
  %160 = vmatpush.xpose.msra.mxu0 0.0
  %161 = vmatpush.xpose.msra.mxu0 %v108
  %162 = vmatpush.xpose.msra.mxu0 %v107
  %163 = vmatpush.xpose.msra.mxu0 %v106
  %164 = vmatpush.xpose.msra.mxu0 %v105
  %165 = vmatmul.f32.gmra.mxu0 %v148
  %v166 = vpop.f32.mrf.mxu0
  %v167 = vadd.f32 0.0, %v166
  %168 = vdwg.mxu0
  %v169 = vmul.f32 %v167, %v22
  %v170 = vadd.f32 %v169, %v23
  %s171 = scalar_lea.vmem %s5, 8
  %172 = vst.msk [vmem:[%s171] sm:$0x7f] %vm102, %v170
  // Predicated region
  $region22: #{baseline_forward.1} parent=0 // pred_check
    _
  $region23: #{baseline_forward.1} parent=0 // pred_check_branch
    %174 = sbr.rel (0) target = $region25
  $region24: #{baseline_forward.1} parent=0 // pred_region
    _
  $region25: #{baseline_forward.1} parent=0 // pred_fallthru
    _
  // Predicated region
  $region26: #{baseline_forward.1} parent=0 // pred_check
    _
  $region27: #{baseline_forward.1} parent=0 // pred_check_branch
    %176 = sbr.rel (0) target = $region29
  $region28: #{baseline_forward.1} parent=0 // pred_region
    _
  $region29: #{baseline_forward.1} parent=0 // pred_fallthru
    _

</llo_original>
